<compile_context>
chip_gen: v6e
topology: v6e:2x2x1
jax: 0.10.0
libtpu: 0.0.40
codegen_flags: <defaults>
</compile_context>

<pallas_src>
import numpy as np
import jax
import jax.numpy as jnp
from jax.experimental import pallas as pl
from jax.experimental.pallas import tpu as pltpu

FILTER_SIZES = [1, 2, 3, 4, 5, 6, 7, 8, 9, 10, 15, 20]
NUM_FILTERS = [10, 20, 20, 20, 20, 10, 10, 10, 10, 10, 16, 16]
TOTAL_FILTERS = sum(NUM_FILTERS)          # 172
H_PAD = 256                               # lane-dense padded feature width
FS_MAX = max(FILTER_SIZES)                # 20
NEG_INF = -1e30


# ----------------------------------------------------------------------------
# The single fused kernel: conv-GEMM + masked max-pool + highway + dropout.
# ----------------------------------------------------------------------------
def _make_fused_kernel(B, S_pad):
    def kernel(lhs_ref, w_ref, cb_ref, thr_ref, whw_ref, bhw_ref, drop_ref,
               out_ref):
        # --- all 12 conv groups as ONE im2col matmul (f32 accumulation) -----
        acc = jnp.dot(lhs_ref[...], w_ref[...],
                      preferred_element_type=jnp.float32) + cb_ref[...]
        acc = acc.reshape(B, S_pad, H_PAD)

        # --- invalidate positions where the window runs past S (and padding
        #     rows): t >= S - fs + 1  ->  -inf, via iota/threshold select ----
        t = jax.lax.broadcasted_iota(jnp.int32, (B, S_pad, H_PAD), 1)
        thr = thr_ref[...].reshape(1, 1, H_PAD)
        acc = jnp.where(t < thr, acc, NEG_INF)

        # --- full-extent max-pool: single reduce over the aligned seq axis --
        pooled = jnp.max(acc, axis=1)                          # (B, 256) f32

        # --- highway: fused [proj | transform] matmul ------------------------
        z = jnp.dot(pooled, whw_ref[...],
                    preferred_element_type=jnp.float32) + bhw_ref[...]  # (B,512)
        proj = jnp.maximum(z[:, :H_PAD], 0.0)
        gate = jax.nn.sigmoid(z[:, H_PAD:])
        hw = gate * proj + (1.0 - gate) * pooled

        # --- dropout(p=0.25): precomputed scaled keep-mask ------------------
        out_ref[...] = hw * drop_ref[...]

    return kernel


# ----------------------------------------------------------------------------
# Wrapper: embedding gather + im2col layout plumbing, then one pallas_call.
# ----------------------------------------------------------------------------
def discriminator_forward(params, tokens, dropout_key):
    B, S = tokens.shape
    assert S >= FS_MAX, "max_seq_len must be >= largest filter size (20)"
    E = params["embedding"].shape[1]
    S_pad = -(-S // 8) * 8                     # sublane-aligned sequence length

    # Embedding row gather with XLA's native gather (f32, table stays in HBM).
    emb = jnp.take(params["embedding"], tokens, axis=0)          # (B, S, E)

    # im2col: for every position t, the FS_MAX-row window laid along K.
    emb_pad = jnp.pad(emb, ((0, 0), (0, S_pad - S + FS_MAX), (0, 0)))
    win = np.arange(S_pad)[:, None] + np.arange(FS_MAX)[None, :]  # (S_pad, 20)
    lhs = emb_pad[:, win, :].reshape(B * S_pad, FS_MAX * E)       # (B*S_pad, 640)

    # Per-column valid-position threshold: position t is valid iff t < S-fs+1.
    fs_col = np.concatenate(
        [np.full(nf, fs, np.int32) for fs, nf in zip(FILTER_SIZES, NUM_FILTERS)]
        + [np.ones(H_PAD - TOTAL_FILTERS, np.int32)])
    thr = jnp.asarray((S - fs_col + 1).reshape(1, H_PAD), jnp.int32)

    # Dropout(p=0.25) keep-mask, drawn host-side.
    # TODO(synk): torch's RNG stream is not reproducible; the mask matches the
    # PyTorch reference in distribution only, not bitwise.
    keep = jax.random.bernoulli(dropout_key, 0.75, (B, H_PAD))
    drop = keep.astype(jnp.float32) * (1.0 / 0.75)

    vmem = pl.BlockSpec(memory_space=pltpu.MemorySpace.VMEM)
    out = pl.pallas_call(
        _make_fused_kernel(B, S_pad),
        out_shape=jax.ShapeDtypeStruct((B, H_PAD), jnp.float32),
        in_specs=[vmem] * 7,
        out_specs=vmem,
    )(lhs, params["conv_w"], params["conv_b"], thr,
      params["highway_w"], params["highway_b"], drop)
    return out[:, :TOTAL_FILTERS]                                # (B, 172)


# ----------------------------------------------------------------------------
# Deterministic synthetic parameter init (padded, GEMM-ready layouts, f32).
# ----------------------------------------------------------------------------
def init_params(key, n_vocab, embedding_size):
    E = embedding_size
    keys = jax.random.split(key, 4)
    table = 0.1 * jax.random.normal(keys[0], (n_vocab, E), jnp.float32)

    # Conv weights: torch (nf, 1, fs, E) -> rows [0:fs] of a (20, E, 256) slab,
    # then reshaped to the im2col RHS (20*E, 256).
    conv_w = np.zeros((FS_MAX, E, H_PAD), np.float32)
    conv_b = np.zeros((1, H_PAD), np.float32)
    kws = jax.random.split(keys[1], len(FILTER_SIZES))
    kbs = jax.random.split(keys[2], len(FILTER_SIZES))
    col = 0
    for i, (fs, nf) in enumerate(zip(FILTER_SIZES, NUM_FILTERS)):
        w = 0.1 * jax.random.normal(kws[i], (fs, E, nf), jnp.float32)
        b = 0.1 * jax.random.normal(kbs[i], (1, nf), jnp.float32)
        conv_w[:fs, :, col:col + nf] = np.asarray(w)
        conv_b[:, col:col + nf] = np.asarray(b)
        col += nf

    # Highway: [Wp | Wt] fused, stored (in, out), zero-padded to 256 lanes.
    H = TOTAL_FILTERS
    kp, kt, kb = jax.random.split(keys[3], 3)
    wp = 0.05 * jax.random.normal(kp, (H, H), jnp.float32)
    wt = 0.05 * jax.random.normal(kt, (H, H), jnp.float32)
    bp = 0.05 * jax.random.normal(kb, (H,), jnp.float32)
    whw = np.zeros((H_PAD, 2 * H_PAD), np.float32)
    whw[:H, :H] = np.asarray(wp)
    whw[:H, H_PAD:H_PAD + H] = np.asarray(wt)
    bhw = np.zeros((1, 2 * H_PAD), np.float32)
    bhw[0, :H] = np.asarray(bp)
    bhw[0, H_PAD:H_PAD + H] = -2.0            # transform.bias.data.fill_(-2.0)

    return {
        "embedding": table,
        "conv_w": jnp.asarray(conv_w.reshape(FS_MAX * E, H_PAD)),
        "conv_b": jnp.asarray(conv_b),
        "highway_w": jnp.asarray(whw),
        "highway_b": jnp.asarray(bhw),
    }


# ----------------------------------------------------------------------------
# Pure-JAX reference (structurally different per-group conv) for cross-check.
# ----------------------------------------------------------------------------
def _forward_reference(params, tokens, dropout_key):
    B, S = tokens.shape
    E = params["embedding"].shape[1]
    hi = jax.lax.Precision.HIGHEST
    emb = params["embedding"][tokens]                          # (B, S, E)
    w_slab = params["conv_w"].reshape(FS_MAX, E, H_PAD)
    cb = params["conv_b"][0]
    feats, col = [], 0
    for fs, nf in zip(FILTER_SIZES, NUM_FILTERS):
        w = w_slab[:fs, :, col:col + nf]                       # (fs, E, nf)
        L = S - fs + 1
        windows = jnp.stack([emb[:, k:k + L, :] for k in range(fs)], axis=2)
        conv = jnp.einsum("blke,kef->blf", windows, w,
                          precision=hi) + cb[col:col + nf]
        feats.append(jnp.max(conv, axis=1))                    # (B, nf)
        col += nf
    pooled = jnp.concatenate(feats, axis=1)                    # (B, 172)
    H = TOTAL_FILTERS
    wp = params["highway_w"][:H, :H]
    wt = params["highway_w"][:H, H_PAD:H_PAD + H]
    bp = params["highway_b"][0, :H]
    bt = params["highway_b"][0, H_PAD:H_PAD + H]
    proj = jax.nn.relu(jnp.dot(pooled, wp, precision=hi) + bp)
    gate = jax.nn.sigmoid(jnp.dot(pooled, wt, precision=hi) + bt)
    hw = gate * proj + (1.0 - gate) * pooled
    keep = jax.random.bernoulli(dropout_key, 0.75, (B, H_PAD))
    drop = keep.astype(jnp.float32) * (1.0 / 0.75)
    return hw * drop[:, :H]


if __name__ == "__main__":
    B, S, E, V = 4, 20, 32, 50    # S must be >= 20 (largest filter size)
    key = jax.random.PRNGKey(0)
    k_tok, k_par, k_drop = jax.random.split(key, 3)
    tokens = jax.random.randint(k_tok, (B, S), 0, V, dtype=jnp.int32)
    params = init_params(k_par, V, E)

    fwd = jax.jit(discriminator_forward)
    out = jax.block_until_ready(fwd(params, tokens, k_drop))

    assert out.shape == (B, TOTAL_FILTERS) and out.dtype == jnp.float32
    assert bool(jnp.all(jnp.isfinite(out)))

    ref = _forward_reference(params, tokens, k_drop)
    err = float(jnp.max(jnp.abs(out - ref)))
    assert err < 5e-2, f"mismatch vs pure-JAX reference: max|err|={err}"
    print("KERNEL_OK")
</pallas_src>

<mosaic_0001>
module attributes {stable_mosaic.version = 11 : i64} {
  func.func @kernel(%arg0: memref<96x640xf32, #tpu.memory_space<vmem>>, %arg1: memref<640x256xf32, #tpu.memory_space<vmem>>, %arg2: memref<1x256xf32, #tpu.memory_space<vmem>>, %arg3: memref<1x256xi32, #tpu.memory_space<vmem>>, %arg4: memref<256x512xf32, #tpu.memory_space<vmem>>, %arg5: memref<1x512xf32, #tpu.memory_space<vmem>>, %arg6: memref<4x256xf32, #tpu.memory_space<vmem>>, %arg7: memref<4x256xf32, #tpu.memory_space<vmem>>) attributes {dimension_semantics = [], scalar_prefetch = 0 : i64, scratch_operands = 0 : i64, tpu.core_type = #tpu.core_type<tc>} {
    %c0 = arith.constant 0 : index
    %c0_0 = arith.constant 0 : index
    %0 = vector.load %arg0[%c0, %c0_0] : memref<96x640xf32, #tpu.memory_space<vmem>>, vector<96x640xf32>
    %c0_1 = arith.constant 0 : index
    %c0_2 = arith.constant 0 : index
    %1 = vector.load %arg1[%c0_1, %c0_2] : memref<640x256xf32, #tpu.memory_space<vmem>>, vector<640x256xf32>
    %cst = arith.constant dense<0.000000e+00> : vector<96x256xf32>
    %2 = tpu.matmul %0, %1, %cst {dimension_numbers = #tpu.dot_dimension_numbers<[1], [0], [0], [1], [0, 0, 1, 1], [], []>} : vector<96x640xf32>, vector<640x256xf32>, vector<96x256xf32> -> vector<96x256xf32>
    %c0_3 = arith.constant 0 : index
    %c0_4 = arith.constant 0 : index
    %3 = vector.load %arg2[%c0_3, %c0_4] : memref<1x256xf32, #tpu.memory_space<vmem>>, vector<1x256xf32>
    %4 = vector.broadcast %3 : vector<1x256xf32> to vector<96x256xf32>
    %5 = arith.addf %2, %4 : vector<96x256xf32>
    %6 = vector.shape_cast %5 : vector<96x256xf32> to vector<4x24x256xf32>
    %7 = tpu.iota {dimensions = array<i32: 1>} : vector<4x24x256xi32>
    %c0_5 = arith.constant 0 : index
    %c0_6 = arith.constant 0 : index
    %8 = vector.load %arg3[%c0_5, %c0_6] : memref<1x256xi32, #tpu.memory_space<vmem>>, vector<1x256xi32>
    %9 = vector.shape_cast %8 : vector<1x256xi32> to vector<1x1x256xi32>
    %10 = vector.broadcast %9 : vector<1x1x256xi32> to vector<4x24x256xi32>
    %11 = arith.cmpi slt, %7, %10 : vector<4x24x256xi32>
    %cst_7 = arith.constant -1.000000e+30 : f32
    %12 = vector.broadcast %cst_7 : f32 to vector<4x24x256xf32>
    %13 = arith.select %11, %6, %12 : vector<4x24x256xi1>, vector<4x24x256xf32>
    %cst_8 = arith.constant dense<0xFF800000> : vector<4x256xf32>
    %14 = vector.multi_reduction <maximumf>, %13, %cst_8 [1] : vector<4x24x256xf32> to vector<4x256xf32>
    %c0_9 = arith.constant 0 : index
    %c0_10 = arith.constant 0 : index
    %15 = vector.load %arg4[%c0_9, %c0_10] : memref<256x512xf32, #tpu.memory_space<vmem>>, vector<256x512xf32>
    %cst_11 = arith.constant dense<0.000000e+00> : vector<4x512xf32>
    %16 = tpu.matmul %14, %15, %cst_11 {dimension_numbers = #tpu.dot_dimension_numbers<[1], [0], [0], [1], [0, 0, 1, 1], [], []>} : vector<4x256xf32>, vector<256x512xf32>, vector<4x512xf32> -> vector<4x512xf32>
    %c0_12 = arith.constant 0 : index
    %c0_13 = arith.constant 0 : index
    %17 = vector.load %arg5[%c0_12, %c0_13] : memref<1x512xf32, #tpu.memory_space<vmem>>, vector<1x512xf32>
    %18 = vector.broadcast %17 : vector<1x512xf32> to vector<4x512xf32>
    %19 = arith.addf %16, %18 : vector<4x512xf32>
    %20 = vector.extract_strided_slice %19 {offsets = [0, 0], sizes = [4, 256], strides = [1, 1]} : vector<4x512xf32> to vector<4x256xf32>
    %cst_14 = arith.constant 0.000000e+00 : f32
    %21 = vector.broadcast %cst_14 : f32 to vector<4x256xf32>
    %22 = arith.maximumf %20, %21 : vector<4x256xf32>
    %23 = vector.extract_strided_slice %19 {offsets = [0, 256], sizes = [4, 256], strides = [1, 1]} : vector<4x512xf32> to vector<4x256xf32>
    %24 = arith.negf %23 : vector<4x256xf32>
    %25 = math.exp %24 : vector<4x256xf32>
    %cst_15 = arith.constant 1.000000e+00 : f32
    %26 = vector.broadcast %cst_15 : f32 to vector<4x256xf32>
    %27 = arith.addf %26, %25 : vector<4x256xf32>
    %28 = arith.divf %26, %27 : vector<4x256xf32>
    %29 = arith.mulf %28, %22 : vector<4x256xf32>
    %cst_16 = arith.constant 1.000000e+00 : f32
    %30 = vector.broadcast %cst_16 : f32 to vector<4x256xf32>
    %31 = arith.subf %30, %28 : vector<4x256xf32>
    %32 = arith.mulf %31, %14 : vector<4x256xf32>
    %33 = arith.addf %29, %32 : vector<4x256xf32>
    %c0_17 = arith.constant 0 : index
    %c0_18 = arith.constant 0 : index
    %34 = vector.load %arg6[%c0_17, %c0_18] : memref<4x256xf32, #tpu.memory_space<vmem>>, vector<4x256xf32>
    %35 = arith.mulf %33, %34 : vector<4x256xf32>
    %c0_19 = arith.constant 0 : index
    %c0_20 = arith.constant 0 : index
    %36 = vector.load %arg7[%c0_19, %c0_20] : memref<4x256xf32, #tpu.memory_space<vmem>>, vector<4x256xf32>
    tpu.vector_store %arg7[%c0_19, %c0_20], %35 {strides = array<i32>} : memref<4x256xf32, #tpu.memory_space<vmem>>, vector<4x256xf32>,
    return
  }
}

</mosaic_0001>

<llo_original>
// kernel: discriminator_forward.1
$region0: #{discriminator_forward.1}
  #allocation0 [shape = 'u32[]', space=smem, size = 0x4, offset = 0x4, fixed_abs, tag = 'smem constant byte address 0x4 - core index']
  #allocation1 [shape = 'u32[144,128]{1,0:T(1,128)}', space=vmem, size = 0x12000, scoped, tag = 'internal scratch']
  %s0 = inlined_call_operand.vmem [shape: f32[96,640], index: 0, kind: input, shape index: {}]
  %s1 = inlined_call_operand.vmem [shape: f32[640,256], index: 1, kind: input, shape index: {}]
  %s2 = inlined_call_operand.vmem [shape: f32[1,256], index: 2, kind: input, shape index: {}]
  %s3 = inlined_call_operand.vmem [shape: s32[1,256], index: 3, kind: input, shape index: {}]
  %s4 = inlined_call_operand.vmem [shape: f32[256,512], index: 4, kind: input, shape index: {}]
  %s5 = inlined_call_operand.vmem [shape: f32[1,512], index: 5, kind: input, shape index: {}]
  %s6 = inlined_call_operand.vmem [shape: f32[4,256], index: 6, kind: input, shape index: {}]
  %s7 = inlined_call_operand.hbm [shape: f32[4,256], index: 7, kind: output, shape index: {}]
  %s8 = sld [smem:[#allocation0]]
  $region38: #{discriminator_forward.1} parent=0
    _
  %s10 = ssub.s32 1, %s8
  %s11 = scalar_select 0, %s10, %s8
  $region1: #{discriminator_forward.1} parent=0
    #allocation2 [shape = 'u8[4096]{0}', space=vmem, size = 0x1000, scoped, tag = 'output window, operand 0, single buffered']
    #allocation3 [shape = 's32[1]{0}', space=sflag, size = 0x4, scoped, tag = 'scoped memory for discriminator_forward.1']
    %12 = vsyncpa [#allocation3], 0
    // Predicated region
    $region2: #{discriminator_forward.1} parent=1 // pred_check
      _
    $region3: #{discriminator_forward.1} parent=1 // pred_check_branch
      %14 = sbr.rel (0) target = $region5
    $region4: #{discriminator_forward.1} parent=1 // pred_region
      _
    $region5: #{discriminator_forward.1} parent=1 // pred_fallthru
      _
    // Predicated region
    $region6: #{discriminator_forward.1} parent=1 // pred_check
      _
    $region7: #{discriminator_forward.1} parent=1 // pred_check_branch
      %16 = sbr.rel (0) target = $region9
    $region8: #{discriminator_forward.1} parent=1 // pred_region
      _
    $region9: #{discriminator_forward.1} parent=1 // pred_fallthru
      _
    // Predicated region
    $region10: #{discriminator_forward.1} parent=1 // pred_check
      _
    $region11: #{discriminator_forward.1} parent=1 // pred_check_branch
      %18 = sbr.rel (0) target = $region13
    $region12: #{discriminator_forward.1} parent=1 // pred_region
      _
    $region13: #{discriminator_forward.1} parent=1 // pred_fallthru
      _
    // Predicated region
    $region14: #{discriminator_forward.1} parent=1 // pred_check
      _
    $region15: #{discriminator_forward.1} parent=1 // pred_check_branch
      %20 = sbr.rel (0) target = $region17
    $region16: #{discriminator_forward.1} parent=1 // pred_region
      _
    $region17: #{discriminator_forward.1} parent=1 // pred_fallthru
      _
    // Predicated region
    $region18: #{discriminator_forward.1} parent=1 // pred_check
      _
    $region19: #{discriminator_forward.1} parent=1 // pred_check_branch
      %22 = sbr.rel (0) target = $region21
    $region20: #{discriminator_forward.1} parent=1 // pred_region
      _
    $region21: #{discriminator_forward.1} parent=1 // pred_fallthru
      _
    // Predicated region
    $region22: #{discriminator_forward.1} parent=1 // pred_check
      _
    $region23: #{discriminator_forward.1} parent=1 // pred_check_branch
      %24 = sbr.rel (0) target = $region25
    $region24: #{discriminator_forward.1} parent=1 // pred_region
      _
    $region25: #{discriminator_forward.1} parent=1 // pred_fallthru
      _
    // Predicated region
    $region26: #{discriminator_forward.1} parent=1 // pred_check
      _
    $region27: #{discriminator_forward.1} parent=1 // pred_check_branch
      %26 = sbr.rel (0) target = $region29
    $region28: #{discriminator_forward.1} parent=1 // pred_region
      _
    $region29: #{discriminator_forward.1} parent=1 // pred_fallthru
      _
    %v27 = vld [vmem:[%s0] sm:$0xff]
    %v28 = vld [vmem:[%s0 + $0x8] sm:$0xff]
    %v29 = vld [vmem:[%s0 + $0x10] sm:$0xff]
    %v30 = vld [vmem:[%s0 + $0x18] sm:$0xff]
    %v31 = vld [vmem:[%s0 + $0x20] sm:$0xff]
    %v32 = vld [vmem:[%s0 + $0x28] sm:$0xff]
    %v33 = vld [vmem:[%s0 + $0x30] sm:$0xff]
    %v34 = vld [vmem:[%s0 + $0x38] sm:$0xff]
    %v35 = vld [vmem:[%s0 + $0x40] sm:$0xff]
    %v36 = vld [vmem:[%s0 + $0x48] sm:$0xff]
    %v37 = vld [vmem:[%s0 + $0x50] sm:$0xff]
    %v38 = vld [vmem:[%s0 + $0x58] sm:$0xff]
    %v39 = vld [vmem:[%s0 + $0x60] sm:$0xff]
    %v40 = vld [vmem:[%s0 + $0x68] sm:$0xff]
    %v41 = vld [vmem:[%s0 + $0x70] sm:$0xff]
    %v42 = vld [vmem:[%s0 + $0x78] sm:$0xff]
    %v43 = vld [vmem:[%s0 + $0x80] sm:$0xff]
    %v44 = vld [vmem:[%s0 + $0x88] sm:$0xff]
    %v45 = vld [vmem:[%s0 + $0x90] sm:$0xff]
    %v46 = vld [vmem:[%s0 + $0x98] sm:$0xff]
    %v47 = vld [vmem:[%s0 + $0xa0] sm:$0xff]
    %v48 = vld [vmem:[%s0 + $0xa8] sm:$0xff]
    %v49 = vld [vmem:[%s0 + $0xb0] sm:$0xff]
    %v50 = vld [vmem:[%s0 + $0xb8] sm:$0xff]
    %v51 = vld [vmem:[%s0 + $0xc0] sm:$0xff]
    %v52 = vld [vmem:[%s0 + $0xc8] sm:$0xff]
    %v53 = vld [vmem:[%s0 + $0xd0] sm:$0xff]
    %v54 = vld [vmem:[%s0 + $0xd8] sm:$0xff]
    %v55 = vld [vmem:[%s0 + $0xe0] sm:$0xff]
    %v56 = vld [vmem:[%s0 + $0xe8] sm:$0xff]
    %v57 = vld [vmem:[%s0 + $0xf0] sm:$0xff]
    %v58 = vld [vmem:[%s0 + $0xf8] sm:$0xff]
    %v59 = vld [vmem:[%s0 + $0x100] sm:$0xff]
    %v60 = vld [vmem:[%s0 + $0x108] sm:$0xff]
    %v61 = vld [vmem:[%s0 + $0x110] sm:$0xff]
    %v62 = vld [vmem:[%s0 + $0x118] sm:$0xff]
    %v63 = vld [vmem:[%s0 + $0x120] sm:$0xff]
    %v64 = vld [vmem:[%s0 + $0x128] sm:$0xff]
    %v65 = vld [vmem:[%s0 + $0x130] sm:$0xff]
    %v66 = vld [vmem:[%s0 + $0x138] sm:$0xff]
    %v67 = vld [vmem:[%s0 + $0x140] sm:$0xff]
    %v68 = vld [vmem:[%s0 + $0x148] sm:$0xff]
    %v69 = vld [vmem:[%s0 + $0x150] sm:$0xff]
    %v70 = vld [vmem:[%s0 + $0x158] sm:$0xff]
    %v71 = vld [vmem:[%s0 + $0x160] sm:$0xff]
    %v72 = vld [vmem:[%s0 + $0x168] sm:$0xff]
    %v73 = vld [vmem:[%s0 + $0x170] sm:$0xff]
    %v74 = vld [vmem:[%s0 + $0x178] sm:$0xff]
    %v75 = vld [vmem:[%s0 + $0x180] sm:$0xff]
    %v76 = vld [vmem:[%s0 + $0x188] sm:$0xff]
    %v77 = vld [vmem:[%s0 + $0x190] sm:$0xff]
    %v78 = vld [vmem:[%s0 + $0x198] sm:$0xff]
    %v79 = vld [vmem:[%s0 + $0x1a0] sm:$0xff]
    %v80 = vld [vmem:[%s0 + $0x1a8] sm:$0xff]
    %v81 = vld [vmem:[%s0 + $0x1b0] sm:$0xff]
    %v82 = vld [vmem:[%s0 + $0x1b8] sm:$0xff]
    %v83 = vld [vmem:[%s0 + $0x1c0] sm:$0xff]
    %v84 = vld [vmem:[%s0 + $0x1c8] sm:$0xff]
    %v85 = vld [vmem:[%s0 + $0x1d0] sm:$0xff]
    %v86 = vld [vmem:[%s0 + $0x1d8] sm:$0xff]
    %v87 = vld [vmem:[%s1] sm:$0xff]
    %v88 = vld [vmem:[%s1 + $0x8] sm:$0xff]
    %v89 = vld [vmem:[%s1 + $0x10] sm:$0xff]
    %v90 = vld [vmem:[%s1 + $0x18] sm:$0xff]
    %v91 = vld [vmem:[%s1 + $0x20] sm:$0xff]
    %v92 = vld [vmem:[%s1 + $0x28] sm:$0xff]
    %v93 = vld [vmem:[%s1 + $0x30] sm:$0xff]
    %v94 = vld [vmem:[%s1 + $0x38] sm:$0xff]
    %v95 = vld [vmem:[%s1 + $0x40] sm:$0xff]
    %v96 = vld [vmem:[%s1 + $0x48] sm:$0xff]
    %v97 = vld [vmem:[%s1 + $0x50] sm:$0xff]
    %v98 = vld [vmem:[%s1 + $0x58] sm:$0xff]
    %v99 = vld [vmem:[%s1 + $0x60] sm:$0xff]
    %v100 = vld [vmem:[%s1 + $0x68] sm:$0xff]
    %v101 = vld [vmem:[%s1 + $0x70] sm:$0xff]
    %v102 = vld [vmem:[%s1 + $0x78] sm:$0xff]
    %v103 = vld [vmem:[%s1 + $0x80] sm:$0xff]
    %v104 = vld [vmem:[%s1 + $0x88] sm:$0xff]
    %v105 = vld [vmem:[%s1 + $0x90] sm:$0xff]
    %v106 = vld [vmem:[%s1 + $0x98] sm:$0xff]
    %v107 = vld [vmem:[%s1 + $0xa0] sm:$0xff]
    %v108 = vld [vmem:[%s1 + $0xa8] sm:$0xff]
    %v109 = vld [vmem:[%s1 + $0xb0] sm:$0xff]
    %v110 = vld [vmem:[%s1 + $0xb8] sm:$0xff]
    %v111 = vld [vmem:[%s1 + $0xc0] sm:$0xff]
    %v112 = vld [vmem:[%s1 + $0xc8] sm:$0xff]
    %v113 = vld [vmem:[%s1 + $0xd0] sm:$0xff]
    %v114 = vld [vmem:[%s1 + $0xd8] sm:$0xff]
    %v115 = vld [vmem:[%s1 + $0xe0] sm:$0xff]
    %v116 = vld [vmem:[%s1 + $0xe8] sm:$0xff]
    %v117 = vld [vmem:[%s1 + $0xf0] sm:$0xff]
    %v118 = vld [vmem:[%s1 + $0xf8] sm:$0xff]
    %v119 = vld [vmem:[%s1 + $0x100] sm:$0xff]
    %v120 = vld [vmem:[%s1 + $0x108] sm:$0xff]
    %v121 = vld [vmem:[%s1 + $0x110] sm:$0xff]
    %v122 = vld [vmem:[%s1 + $0x118] sm:$0xff]
    %v123 = vld [vmem:[%s1 + $0x120] sm:$0xff]
    %v124 = vld [vmem:[%s1 + $0x128] sm:$0xff]
    %v125 = vld [vmem:[%s1 + $0x130] sm:$0xff]
    %v126 = vld [vmem:[%s1 + $0x138] sm:$0xff]
    %v127 = vld [vmem:[%s1 + $0x140] sm:$0xff]
    %v128 = vld [vmem:[%s1 + $0x148] sm:$0xff]
    %v129 = vld [vmem:[%s1 + $0x150] sm:$0xff]
    %v130 = vld [vmem:[%s1 + $0x158] sm:$0xff]
    %v131 = vld [vmem:[%s1 + $0x160] sm:$0xff]
    %v132 = vld [vmem:[%s1 + $0x168] sm:$0xff]
    %v133 = vld [vmem:[%s1 + $0x170] sm:$0xff]
    %v134 = vld [vmem:[%s1 + $0x178] sm:$0xff]
    %v135 = vld [vmem:[%s1 + $0x180] sm:$0xff]
    %v136 = vld [vmem:[%s1 + $0x188] sm:$0xff]
    %v137 = vld [vmem:[%s1 + $0x190] sm:$0xff]
    %v138 = vld [vmem:[%s1 + $0x198] sm:$0xff]
    %v139 = vld [vmem:[%s1 + $0x1a0] sm:$0xff]
    %v140 = vld [vmem:[%s1 + $0x1a8] sm:$0xff]
    %v141 = vld [vmem:[%s1 + $0x1b0] sm:$0xff]
    %v142 = vld [vmem:[%s1 + $0x1b8] sm:$0xff]
    %v143 = vld [vmem:[%s1 + $0x1c0] sm:$0xff]
    %v144 = vld [vmem:[%s1 + $0x1c8] sm:$0xff]
    %v145 = vld [vmem:[%s1 + $0x1d0] sm:$0xff]
    %v146 = vld [vmem:[%s1 + $0x1d8] sm:$0xff]
    %v147 = vld [vmem:[%s1 + $0x1e0] sm:$0xff]
    %v148 = vld [vmem:[%s1 + $0x1e8] sm:$0xff]
    %v149 = vld [vmem:[%s1 + $0x1f0] sm:$0xff]
    %v150 = vld [vmem:[%s1 + $0x1f8] sm:$0xff]
    %v151 = vld [vmem:[%s1 + $0x200] sm:$0xff]
    %v152 = vld [vmem:[%s1 + $0x208] sm:$0xff]
    %v153 = vld [vmem:[%s1 + $0x210] sm:$0xff]
    %v154 = vld [vmem:[%s1 + $0x218] sm:$0xff]
    %v155 = vld [vmem:[%s1 + $0x220] sm:$0xff]
    %v156 = vld [vmem:[%s1 + $0x228] sm:$0xff]
    %v157 = vld [vmem:[%s1 + $0x230] sm:$0xff]
    %v158 = vld [vmem:[%s1 + $0x238] sm:$0xff]
    %v159 = vld [vmem:[%s1 + $0x240] sm:$0xff]
    %v160 = vld [vmem:[%s1 + $0x248] sm:$0xff]
    %v161 = vld [vmem:[%s1 + $0x250] sm:$0xff]
    %v162 = vld [vmem:[%s1 + $0x258] sm:$0xff]
    %v163 = vld [vmem:[%s1 + $0x260] sm:$0xff]
    %v164 = vld [vmem:[%s1 + $0x268] sm:$0xff]
    %v165 = vld [vmem:[%s1 + $0x270] sm:$0xff]
    %v166 = vld [vmem:[%s1 + $0x278] sm:$0xff]
    %v167 = vld [vmem:[%s1 + $0x280] sm:$0xff]
    %v168 = vld [vmem:[%s1 + $0x288] sm:$0xff]
    %v169 = vld [vmem:[%s1 + $0x290] sm:$0xff]
    %v170 = vld [vmem:[%s1 + $0x298] sm:$0xff]
    %v171 = vld [vmem:[%s1 + $0x2a0] sm:$0xff]
    %v172 = vld [vmem:[%s1 + $0x2a8] sm:$0xff]
    %v173 = vld [vmem:[%s1 + $0x2b0] sm:$0xff]
    %v174 = vld [vmem:[%s1 + $0x2b8] sm:$0xff]
    %v175 = vld [vmem:[%s1 + $0x2c0] sm:$0xff]
    %v176 = vld [vmem:[%s1 + $0x2c8] sm:$0xff]
    %v177 = vld [vmem:[%s1 + $0x2d0] sm:$0xff]
    %v178 = vld [vmem:[%s1 + $0x2d8] sm:$0xff]
    %v179 = vld [vmem:[%s1 + $0x2e0] sm:$0xff]
    %v180 = vld [vmem:[%s1 + $0x2e8] sm:$0xff]
    %v181 = vld [vmem:[%s1 + $0x2f0] sm:$0xff]
    %v182 = vld [vmem:[%s1 + $0x2f8] sm:$0xff]
    %v183 = vld [vmem:[%s1 + $0x300] sm:$0xff]
    %v184 = vld [vmem:[%s1 + $0x308] sm:$0xff]
    %v185 = vld [vmem:[%s1 + $0x310] sm:$0xff]
    %v186 = vld [vmem:[%s1 + $0x318] sm:$0xff]
    %v187 = vld [vmem:[%s1 + $0x320] sm:$0xff]
    %v188 = vld [vmem:[%s1 + $0x328] sm:$0xff]
    %v189 = vld [vmem:[%s1 + $0x330] sm:$0xff]
    %v190 = vld [vmem:[%s1 + $0x338] sm:$0xff]
    %v191 = vld [vmem:[%s1 + $0x340] sm:$0xff]
    %v192 = vld [vmem:[%s1 + $0x348] sm:$0xff]
    %v193 = vld [vmem:[%s1 + $0x350] sm:$0xff]
    %v194 = vld [vmem:[%s1 + $0x358] sm:$0xff]
    %v195 = vld [vmem:[%s1 + $0x360] sm:$0xff]
    %v196 = vld [vmem:[%s1 + $0x368] sm:$0xff]
    %v197 = vld [vmem:[%s1 + $0x370] sm:$0xff]
    %v198 = vld [vmem:[%s1 + $0x378] sm:$0xff]
    %v199 = vld [vmem:[%s1 + $0x380] sm:$0xff]
    %v200 = vld [vmem:[%s1 + $0x388] sm:$0xff]
    %v201 = vld [vmem:[%s1 + $0x390] sm:$0xff]
    %v202 = vld [vmem:[%s1 + $0x398] sm:$0xff]
    %v203 = vld [vmem:[%s1 + $0x3a0] sm:$0xff]
    %v204 = vld [vmem:[%s1 + $0x3a8] sm:$0xff]
    %v205 = vld [vmem:[%s1 + $0x3b0] sm:$0xff]
    %v206 = vld [vmem:[%s1 + $0x3b8] sm:$0xff]
    %v207 = vld [vmem:[%s1 + $0x3c0] sm:$0xff]
    %v208 = vld [vmem:[%s1 + $0x3c8] sm:$0xff]
    %v209 = vld [vmem:[%s1 + $0x3d0] sm:$0xff]
    %v210 = vld [vmem:[%s1 + $0x3d8] sm:$0xff]
    %v211 = vld [vmem:[%s1 + $0x3e0] sm:$0xff]
    %v212 = vld [vmem:[%s1 + $0x3e8] sm:$0xff]
    %v213 = vld [vmem:[%s1 + $0x3f0] sm:$0xff]
    %v214 = vld [vmem:[%s1 + $0x3f8] sm:$0xff]
    %v215 = vld [vmem:[%s1 + $0x400] sm:$0xff]
    %v216 = vld [vmem:[%s1 + $0x408] sm:$0xff]
    %v217 = vld [vmem:[%s1 + $0x410] sm:$0xff]
    %v218 = vld [vmem:[%s1 + $0x418] sm:$0xff]
    %v219 = vld [vmem:[%s1 + $0x420] sm:$0xff]
    %v220 = vld [vmem:[%s1 + $0x428] sm:$0xff]
    %v221 = vld [vmem:[%s1 + $0x430] sm:$0xff]
    %v222 = vld [vmem:[%s1 + $0x438] sm:$0xff]
    %v223 = vld [vmem:[%s1 + $0x440] sm:$0xff]
    %v224 = vld [vmem:[%s1 + $0x448] sm:$0xff]
    %v225 = vld [vmem:[%s1 + $0x450] sm:$0xff]
    %v226 = vld [vmem:[%s1 + $0x458] sm:$0xff]
    %v227 = vld [vmem:[%s1 + $0x460] sm:$0xff]
    %v228 = vld [vmem:[%s1 + $0x468] sm:$0xff]
    %v229 = vld [vmem:[%s1 + $0x470] sm:$0xff]
    %v230 = vld [vmem:[%s1 + $0x478] sm:$0xff]
    %v231 = vld [vmem:[%s1 + $0x480] sm:$0xff]
    %v232 = vld [vmem:[%s1 + $0x488] sm:$0xff]
    %v233 = vld [vmem:[%s1 + $0x490] sm:$0xff]
    %v234 = vld [vmem:[%s1 + $0x498] sm:$0xff]
    %v235 = vld [vmem:[%s1 + $0x4a0] sm:$0xff]
    %v236 = vld [vmem:[%s1 + $0x4a8] sm:$0xff]
    %v237 = vld [vmem:[%s1 + $0x4b0] sm:$0xff]
    %v238 = vld [vmem:[%s1 + $0x4b8] sm:$0xff]
    %v239 = vld [vmem:[%s1 + $0x4c0] sm:$0xff]
    %v240 = vld [vmem:[%s1 + $0x4c8] sm:$0xff]
    %v241 = vld [vmem:[%s1 + $0x4d0] sm:$0xff]
    %v242 = vld [vmem:[%s1 + $0x4d8] sm:$0xff]
    %v243 = vld [vmem:[%s1 + $0x4e0] sm:$0xff]
    %v244 = vld [vmem:[%s1 + $0x4e8] sm:$0xff]
    %v245 = vld [vmem:[%s1 + $0x4f0] sm:$0xff]
    %v246 = vld [vmem:[%s1 + $0x4f8] sm:$0xff]
    %v247 = vld [vmem:[%s2] sm:$0x3]
    %v249 = vlaneseq
    %v250 = vshrl.u32 %v249, 7
    %v251 = vsub.s32 0, %v250
    %v252 = vrot.slane %v247, %v251
    %v253 = vlaneseq
    %v254 = vshrl.u32 %v253, 7
    %v255 = vsub.s32 1, %v254
    %v256 = vrot.slane %v247, %v255
    %259 = vmatprep.subr.mxu0 %v118
    %260 = vmatpush1.msra.mxu0 %v117
    %261 = vmatprep.subr.mxu0 %v116
    %262 = vmatpush1.msra.mxu0 %v115
    %263 = vmatprep.subr.mxu0 %v114
    %264 = vmatpush1.msra.mxu0 %v113
    %265 = vmatprep.subr.mxu0 %v112
    %266 = vmatpush1.msra.mxu0 %v111
    %267 = vmatprep.subr.mxu0 %v110
    %268 = vmatpush1.msra.mxu0 %v109
    %269 = vmatprep.subr.mxu0 %v108
    %270 = vmatpush1.msra.mxu0 %v107
    %271 = vmatprep.subr.mxu0 %v106
    %272 = vmatpush1.msra.mxu0 %v105
    %273 = vmatprep.subr.mxu0 %v104
    %274 = vmatpush1.msra.mxu0 %v103
    %275 = vmatprep.subr.mxu0 %v102
    %276 = vmatpush1.msra.mxu0 %v101
    %277 = vmatprep.subr.mxu0 %v100
    %278 = vmatpush1.msra.mxu0 %v99
    %279 = vmatprep.subr.mxu0 %v98
    %280 = vmatpush1.msra.mxu0 %v97
    %281 = vmatprep.subr.mxu0 %v96
    %282 = vmatpush1.msra.mxu0 %v95
    %283 = vmatprep.subr.mxu0 %v94
    %284 = vmatpush1.msra.mxu0 %v93
    %285 = vmatprep.subr.mxu0 %v92
    %286 = vmatpush1.msra.mxu0 %v91
    %287 = vmatprep.subr.mxu0 %v90
    %288 = vmatpush1.msra.mxu0 %v89
    %289 = vmatprep.subr.mxu0 %v88
    %290 = vmatpush1.msra.mxu0 %v87
    %291 = vmatprep.subr.mxu0 %v150
    %292 = vmatpush2.msra.mxu0 %v149
    %293 = vmatprep.subr.mxu0 %v148
    %294 = vmatpush2.msra.mxu0 %v147
    %295 = vmatprep.subr.mxu0 %v146
    %296 = vmatpush2.msra.mxu0 %v145
    %297 = vmatprep.subr.mxu0 %v144
    %298 = vmatpush2.msra.mxu0 %v143
    %299 = vmatprep.subr.mxu0 %v142
    %300 = vmatpush2.msra.mxu0 %v141
    %301 = vmatprep.subr.mxu0 %v140
    %302 = vmatpush2.msra.mxu0 %v139
    %303 = vmatprep.subr.mxu0 %v138
    %304 = vmatpush2.msra.mxu0 %v137
    %305 = vmatprep.subr.mxu0 %v136
    %306 = vmatpush2.msra.mxu0 %v135
    %307 = vmatprep.subr.mxu0 %v134
    %308 = vmatpush2.msra.mxu0 %v133
    %309 = vmatprep.subr.mxu0 %v132
    %310 = vmatpush2.msra.mxu0 %v131
    %311 = vmatprep.subr.mxu0 %v130
    %312 = vmatpush2.msra.mxu0 %v129
    %313 = vmatprep.subr.mxu0 %v128
    %314 = vmatpush2.msra.mxu0 %v127
    %315 = vmatprep.subr.mxu0 %v126
    %316 = vmatpush2.msra.mxu0 %v125
    %317 = vmatprep.subr.mxu0 %v124
    %318 = vmatpush2.msra.mxu0 %v123
    %319 = vmatprep.subr.mxu0 %v122
    %320 = vmatpush2.msra.mxu0 %v121
    %321 = vmatprep.subr.mxu0 %v120
    %322 = vmatpush2.msra.mxu0 %v119
    %323 = vmatprep.mubr.f32.mxu0 %v28
    %324 = vmatmul.mubr.f32.gmra.mxu0 %v27
    %v325 = vpop.f32.mrf.mxu0
    %v326 = vadd.f32 %v252, %v325
    %v327 = vpop.f32.mrf.mxu0
    %v328 = vadd.f32 %v256, %v327
    %329 = vmatprep.mubr.f32.mxu0 %v33
    %330 = vmatmul.mubr.f32.gmra.mxu0 %v32
    %v331 = vpop.f32.mrf.mxu0
    %v332 = vadd.f32 %v252, %v331
    %v333 = vpop.f32.mrf.mxu0
    %v334 = vadd.f32 %v256, %v333
    %335 = vmatprep.mubr.f32.mxu0 %v38
    %336 = vmatmul.mubr.f32.gmra.mxu0 %v37
    %v337 = vpop.f32.mrf.mxu0
    %v338 = vadd.f32 %v252, %v337
    %v339 = vpop.f32.mrf.mxu0
    %v340 = vadd.f32 %v256, %v339
    %341 = vmatprep.mubr.f32.mxu0 %v43
    %342 = vmatmul.mubr.f32.gmra.mxu0 %v42
    %v343 = vpop.f32.mrf.mxu0
    %v344 = vadd.f32 %v252, %v343
    %v345 = vpop.f32.mrf.mxu0
    %v346 = vadd.f32 %v256, %v345
    %347 = vmatprep.mubr.f32.mxu0 %v48
    %348 = vmatmul.mubr.f32.gmra.mxu0 %v47
    %v349 = vpop.f32.mrf.mxu0
    %v350 = vadd.f32 %v252, %v349
    %v351 = vpop.f32.mrf.mxu0
    %v352 = vadd.f32 %v256, %v351
    %353 = vmatprep.mubr.f32.mxu0 %v53
    %354 = vmatmul.mubr.f32.gmra.mxu0 %v52
    %v355 = vpop.f32.mrf.mxu0
    %v356 = vadd.f32 %v252, %v355
    %v357 = vpop.f32.mrf.mxu0
    %v358 = vadd.f32 %v256, %v357
    %359 = vmatprep.mubr.f32.mxu0 %v58
    %360 = vmatmul.mubr.f32.gmra.mxu0 %v57
    %v361 = vpop.f32.mrf.mxu0
    %v362 = vadd.f32 %v252, %v361
    %v363 = vpop.f32.mrf.mxu0
    %v364 = vadd.f32 %v256, %v363
    %365 = vmatprep.mubr.f32.mxu0 %v63
    %366 = vmatmul.mubr.f32.gmra.mxu0 %v62
    %v367 = vpop.f32.mrf.mxu0
    %v368 = vadd.f32 %v252, %v367
    %v369 = vpop.f32.mrf.mxu0
    %v370 = vadd.f32 %v256, %v369
    %371 = vmatprep.mubr.f32.mxu0 %v68
    %372 = vmatmul.mubr.f32.gmra.mxu0 %v67
    %v373 = vpop.f32.mrf.mxu0
    %v374 = vadd.f32 %v252, %v373
    %v375 = vpop.f32.mrf.mxu0
    %v376 = vadd.f32 %v256, %v375
    %377 = vmatprep.mubr.f32.mxu0 %v73
    %378 = vmatmul.mubr.f32.gmra.mxu0 %v72
    %v379 = vpop.f32.mrf.mxu0
    %v380 = vadd.f32 %v252, %v379
    %v381 = vpop.f32.mrf.mxu0
    %v382 = vadd.f32 %v256, %v381
    %383 = vmatprep.mubr.f32.mxu0 %v78
    %384 = vmatmul.mubr.f32.gmra.mxu0 %v77
    %v385 = vpop.f32.mrf.mxu0
    %v386 = vadd.f32 %v252, %v385
    %v387 = vpop.f32.mrf.mxu0
    %v388 = vadd.f32 %v256, %v387
    %389 = vmatprep.mubr.f32.mxu0 %v83
    %390 = vmatmul.mubr.f32.gmra.mxu0 %v82
    %v391 = vpop.f32.mrf.mxu0
    %v392 = vadd.f32 %v252, %v391
    %v393 = vpop.f32.mrf.mxu0
    %v394 = vadd.f32 %v256, %v393
    %395 = vdwg.mxu0
    %396 = vmatprep.subr.mxu0 %v182
    %397 = vmatpush1.msra.mxu0 %v181
    %398 = vmatprep.subr.mxu0 %v180
    %399 = vmatpush1.msra.mxu0 %v179
    %400 = vmatprep.subr.mxu0 %v178
    %401 = vmatpush1.msra.mxu0 %v177
    %402 = vmatprep.subr.mxu0 %v176
    %403 = vmatpush1.msra.mxu0 %v175
    %404 = vmatprep.subr.mxu0 %v174
    %405 = vmatpush1.msra.mxu0 %v173
    %406 = vmatprep.subr.mxu0 %v172
    %407 = vmatpush1.msra.mxu0 %v171
    %408 = vmatprep.subr.mxu0 %v170
    %409 = vmatpush1.msra.mxu0 %v169
    %410 = vmatprep.subr.mxu0 %v168
    %411 = vmatpush1.msra.mxu0 %v167
    %412 = vmatprep.subr.mxu0 %v166
    %413 = vmatpush1.msra.mxu0 %v165
    %414 = vmatprep.subr.mxu0 %v164
    %415 = vmatpush1.msra.mxu0 %v163
    %416 = vmatprep.subr.mxu0 %v162
    %417 = vmatpush1.msra.mxu0 %v161
    %418 = vmatprep.subr.mxu0 %v160
    %419 = vmatpush1.msra.mxu0 %v159
    %420 = vmatprep.subr.mxu0 %v158
    %421 = vmatpush1.msra.mxu0 %v157
    %422 = vmatprep.subr.mxu0 %v156
    %423 = vmatpush1.msra.mxu0 %v155
    %424 = vmatprep.subr.mxu0 %v154
    %425 = vmatpush1.msra.mxu0 %v153
    %426 = vmatprep.subr.mxu0 %v152
    %427 = vmatpush1.msra.mxu0 %v151
    %428 = vmatprep.subr.mxu0 %v214
    %429 = vmatpush2.msra.mxu0 %v213
    %430 = vmatprep.subr.mxu0 %v212
    %431 = vmatpush2.msra.mxu0 %v211
    %432 = vmatprep.subr.mxu0 %v210
    %433 = vmatpush2.msra.mxu0 %v209
    %434 = vmatprep.subr.mxu0 %v208
    %435 = vmatpush2.msra.mxu0 %v207
    %436 = vmatprep.subr.mxu0 %v206
    %437 = vmatpush2.msra.mxu0 %v205
    %438 = vmatprep.subr.mxu0 %v204
    %439 = vmatpush2.msra.mxu0 %v203
    %440 = vmatprep.subr.mxu0 %v202
    %441 = vmatpush2.msra.mxu0 %v201
    %442 = vmatprep.subr.mxu0 %v200
    %443 = vmatpush2.msra.mxu0 %v199
    %444 = vmatprep.subr.mxu0 %v198
    %445 = vmatpush2.msra.mxu0 %v197
    %446 = vmatprep.subr.mxu0 %v196
    %447 = vmatpush2.msra.mxu0 %v195
    %448 = vmatprep.subr.mxu0 %v194
    %449 = vmatpush2.msra.mxu0 %v193
    %450 = vmatprep.subr.mxu0 %v192
    %451 = vmatpush2.msra.mxu0 %v191
    %452 = vmatprep.subr.mxu0 %v190
    %453 = vmatpush2.msra.mxu0 %v189
    %454 = vmatprep.subr.mxu0 %v188
    %455 = vmatpush2.msra.mxu0 %v187
    %456 = vmatprep.subr.mxu0 %v186
    %457 = vmatpush2.msra.mxu0 %v185
    %458 = vmatprep.subr.mxu0 %v184
    %459 = vmatpush2.msra.mxu0 %v183
    %460 = vmatprep.mubr.f32.mxu0 %v30
    %461 = vmatmul.mubr.f32.gmra.mxu0 %v29
    %v462 = vpop.f32.mrf.mxu0
    %v463 = vadd.f32 %v326, %v462
    %v464 = vpop.f32.mrf.mxu0
    %v465 = vadd.f32 %v328, %v464
    %466 = vmatprep.mubr.f32.mxu0 %v35
    %467 = vmatmul.mubr.f32.gmra.mxu0 %v34
    %v468 = vpop.f32.mrf.mxu0
    %v469 = vadd.f32 %v332, %v468
    %v470 = vpop.f32.mrf.mxu0
    %v471 = vadd.f32 %v334, %v470
    %472 = vmatprep.mubr.f32.mxu0 %v40
    %473 = vmatmul.mubr.f32.gmra.mxu0 %v39
    %v474 = vpop.f32.mrf.mxu0
    %v475 = vadd.f32 %v338, %v474
    %v476 = vpop.f32.mrf.mxu0
    %v477 = vadd.f32 %v340, %v476
    %478 = vmatprep.mubr.f32.mxu0 %v45
    %479 = vmatmul.mubr.f32.gmra.mxu0 %v44
    %v480 = vpop.f32.mrf.mxu0
    %v481 = vadd.f32 %v344, %v480
    %v482 = vpop.f32.mrf.mxu0
    %v483 = vadd.f32 %v346, %v482
    %484 = vmatprep.mubr.f32.mxu0 %v50
    %485 = vmatmul.mubr.f32.gmra.mxu0 %v49
    %v486 = vpop.f32.mrf.mxu0
    %v487 = vadd.f32 %v350, %v486
    %v488 = vpop.f32.mrf.mxu0
    %v489 = vadd.f32 %v352, %v488
    %490 = vmatprep.mubr.f32.mxu0 %v55
    %491 = vmatmul.mubr.f32.gmra.mxu0 %v54
    %v492 = vpop.f32.mrf.mxu0
    %v493 = vadd.f32 %v356, %v492
    %v494 = vpop.f32.mrf.mxu0
    %v495 = vadd.f32 %v358, %v494
    %496 = vmatprep.mubr.f32.mxu0 %v60
    %497 = vmatmul.mubr.f32.gmra.mxu0 %v59
    %v498 = vpop.f32.mrf.mxu0
    %v499 = vadd.f32 %v362, %v498
    %v500 = vpop.f32.mrf.mxu0
    %v501 = vadd.f32 %v364, %v500
    %502 = vmatprep.mubr.f32.mxu0 %v65
    %503 = vmatmul.mubr.f32.gmra.mxu0 %v64
    %v504 = vpop.f32.mrf.mxu0
    %v505 = vadd.f32 %v368, %v504
    %v506 = vpop.f32.mrf.mxu0
    %v507 = vadd.f32 %v370, %v506
    %508 = vmatprep.mubr.f32.mxu0 %v70
    %509 = vmatmul.mubr.f32.gmra.mxu0 %v69
    %v510 = vpop.f32.mrf.mxu0
    %v511 = vadd.f32 %v374, %v510
    %v512 = vpop.f32.mrf.mxu0
    %v513 = vadd.f32 %v376, %v512
    %514 = vmatprep.mubr.f32.mxu0 %v75
    %515 = vmatmul.mubr.f32.gmra.mxu0 %v74
    %v516 = vpop.f32.mrf.mxu0
    %v517 = vadd.f32 %v380, %v516
    %v518 = vpop.f32.mrf.mxu0
    %v519 = vadd.f32 %v382, %v518
    %520 = vmatprep.mubr.f32.mxu0 %v80
    %521 = vmatmul.mubr.f32.gmra.mxu0 %v79
    %v522 = vpop.f32.mrf.mxu0
    %v523 = vadd.f32 %v386, %v522
    %v524 = vpop.f32.mrf.mxu0
    %v525 = vadd.f32 %v388, %v524
    %526 = vmatprep.mubr.f32.mxu0 %v85
    %527 = vmatmul.mubr.f32.gmra.mxu0 %v84
    %v528 = vpop.f32.mrf.mxu0
    %v529 = vadd.f32 %v392, %v528
    %v530 = vpop.f32.mrf.mxu0
    %v531 = vadd.f32 %v394, %v530
    %532 = vdwg.mxu0
    %533 = vmatprep.subr.mxu0 %v246
    %534 = vmatpush1.msra.mxu0 %v245
    %535 = vmatprep.subr.mxu0 %v244
    %536 = vmatpush1.msra.mxu0 %v243
    %537 = vmatprep.subr.mxu0 %v242
    %538 = vmatpush1.msra.mxu0 %v241
    %539 = vmatprep.subr.mxu0 %v240
    %540 = vmatpush1.msra.mxu0 %v239
    %541 = vmatprep.subr.mxu0 %v238
    %542 = vmatpush1.msra.mxu0 %v237
    %543 = vmatprep.subr.mxu0 %v236
    %544 = vmatpush1.msra.mxu0 %v235
    %545 = vmatprep.subr.mxu0 %v234
    %546 = vmatpush1.msra.mxu0 %v233
    %547 = vmatprep.subr.mxu0 %v232
    %548 = vmatpush1.msra.mxu0 %v231
    %549 = vmatprep.subr.mxu0 %v230
    %550 = vmatpush1.msra.mxu0 %v229
    %551 = vmatprep.subr.mxu0 %v228
    %552 = vmatpush1.msra.mxu0 %v227
    %553 = vmatprep.subr.mxu0 %v226
    %554 = vmatpush1.msra.mxu0 %v225
    %555 = vmatprep.subr.mxu0 %v224
    %556 = vmatpush1.msra.mxu0 %v223
    %557 = vmatprep.subr.mxu0 %v222
    %558 = vmatpush1.msra.mxu0 %v221
    %559 = vmatprep.subr.mxu0 %v220
    %560 = vmatpush1.msra.mxu0 %v219
    %561 = vmatprep.subr.mxu0 %v218
    %562 = vmatpush1.msra.mxu0 %v217
    %563 = vmatprep.subr.mxu0 %v216
    %564 = vmatpush1.msra.mxu0 %v215
    %565 = vmatprep.subr.mxu0 0.0
    %566 = vmatpush2.msra.mxu0 0.0
    %567 = vmatprep.subr.mxu0 0.0
    %568 = vmatpush2.msra.mxu0 0.0
    %569 = vmatprep.subr.mxu0 0.0
    %570 = vmatpush2.msra.mxu0 0.0
    %571 = vmatprep.subr.mxu0 0.0
    %572 = vmatpush2.msra.mxu0 0.0
    %573 = vmatprep.subr.mxu0 0.0
    %574 = vmatpush2.msra.mxu0 0.0
    %575 = vmatprep.subr.mxu0 0.0
    %576 = vmatpush2.msra.mxu0 0.0
    %577 = vmatprep.subr.mxu0 0.0
    %578 = vmatpush2.msra.mxu0 0.0
    %579 = vmatprep.subr.mxu0 0.0
    %580 = vmatpush2.msra.mxu0 0.0
    %581 = vmatprep.subr.mxu0 0.0
    %582 = vmatpush2.msra.mxu0 0.0
    %583 = vmatprep.subr.mxu0 0.0
    %584 = vmatpush2.msra.mxu0 0.0
    %585 = vmatprep.subr.mxu0 0.0
    %586 = vmatpush2.msra.mxu0 0.0
    %587 = vmatprep.subr.mxu0 0.0
    %588 = vmatpush2.msra.mxu0 0.0
    %589 = vmatprep.subr.mxu0 0.0
    %590 = vmatpush2.msra.mxu0 0.0
    %591 = vmatprep.subr.mxu0 0.0
    %592 = vmatpush2.msra.mxu0 0.0
    %593 = vmatprep.subr.mxu0 0.0
    %594 = vmatpush2.msra.mxu0 0.0
    %595 = vmatprep.subr.mxu0 0.0
    %596 = vmatpush2.msra.mxu0 0.0
    %597 = vmatprep.mubr.f32.mxu0 0.0
    %598 = vmatmul.mubr.f32.gmra.mxu0 %v31
    %v599 = vpop.f32.mrf.mxu0
    %v600 = vadd.f32 %v463, %v599
    %v601 = vpop.f32.mrf.mxu0
    %v602 = vadd.f32 %v465, %v601
    %603 = vmatprep.mubr.f32.mxu0 0.0
    %604 = vmatmul.mubr.f32.gmra.mxu0 %v36
    %v605 = vpop.f32.mrf.mxu0
    %v606 = vadd.f32 %v469, %v605
    %v607 = vpop.f32.mrf.mxu0
    %v608 = vadd.f32 %v471, %v607
    %609 = vmatprep.mubr.f32.mxu0 0.0
    %610 = vmatmul.mubr.f32.gmra.mxu0 %v41
    %v611 = vpop.f32.mrf.mxu0
    %v612 = vadd.f32 %v475, %v611
    %v613 = vpop.f32.mrf.mxu0
    %v614 = vadd.f32 %v477, %v613
    %615 = vmatprep.mubr.f32.mxu0 0.0
    %616 = vmatmul.mubr.f32.gmra.mxu0 %v46
    %v617 = vpop.f32.mrf.mxu0
    %v618 = vadd.f32 %v481, %v617
    %v619 = vpop.f32.mrf.mxu0
    %v620 = vadd.f32 %v483, %v619
    %621 = vmatprep.mubr.f32.mxu0 0.0
    %622 = vmatmul.mubr.f32.gmra.mxu0 %v51
    %v623 = vpop.f32.mrf.mxu0
    %v624 = vadd.f32 %v487, %v623
    %v625 = vpop.f32.mrf.mxu0
    %v626 = vadd.f32 %v489, %v625
    %627 = vmatprep.mubr.f32.mxu0 0.0
    %628 = vmatmul.mubr.f32.gmra.mxu0 %v56
    %v629 = vpop.f32.mrf.mxu0
    %v630 = vadd.f32 %v493, %v629
    %v631 = vpop.f32.mrf.mxu0
    %v632 = vadd.f32 %v495, %v631
    %633 = vmatprep.mubr.f32.mxu0 0.0
    %634 = vmatmul.mubr.f32.gmra.mxu0 %v61
    %v635 = vpop.f32.mrf.mxu0
    %v636 = vadd.f32 %v499, %v635
    %v637 = vpop.f32.mrf.mxu0
    %v638 = vadd.f32 %v501, %v637
    %639 = vmatprep.mubr.f32.mxu0 0.0
    %640 = vmatmul.mubr.f32.gmra.mxu0 %v66
    %v641 = vpop.f32.mrf.mxu0
    %v642 = vadd.f32 %v505, %v641
    %v643 = vpop.f32.mrf.mxu0
    %v644 = vadd.f32 %v507, %v643
    %645 = vmatprep.mubr.f32.mxu0 0.0
    %646 = vmatmul.mubr.f32.gmra.mxu0 %v71
    %v647 = vpop.f32.mrf.mxu0
    %v648 = vadd.f32 %v511, %v647
    %v649 = vpop.f32.mrf.mxu0
    %v650 = vadd.f32 %v513, %v649
    %651 = vmatprep.mubr.f32.mxu0 0.0
    %652 = vmatmul.mubr.f32.gmra.mxu0 %v76
    %v653 = vpop.f32.mrf.mxu0
    %v654 = vadd.f32 %v517, %v653
    %v655 = vpop.f32.mrf.mxu0
    %v656 = vadd.f32 %v519, %v655
    %657 = vmatprep.mubr.f32.mxu0 0.0
    %658 = vmatmul.mubr.f32.gmra.mxu0 %v81
    %v659 = vpop.f32.mrf.mxu0
    %v660 = vadd.f32 %v523, %v659
    %v661 = vpop.f32.mrf.mxu0
    %v662 = vadd.f32 %v525, %v661
    %663 = vmatprep.mubr.f32.mxu0 0.0
    %664 = vmatmul.mubr.f32.gmra.mxu0 %v86
    %v665 = vpop.f32.mrf.mxu0
    %v666 = vadd.f32 %v529, %v665
    %v667 = vpop.f32.mrf.mxu0
    %v668 = vadd.f32 %v531, %v667
    %669 = vdwg.mxu0
    %v670 = vlaneseq
    %v671 = vshrl.u32 %v670, 7
    %v672 = vadd.s32 %v671, 8
    %v673 = vadd.s32 %v671, 16
    %v674 = vld [vmem:[%s3] sm:$0x3]
    %v675 = vlaneseq
    %v676 = vshrl.u32 %v675, 7
    %v677 = vsub.s32 0, %v676
    %v678 = vrot.slane %v674, %v677
    %v679 = vlaneseq
    %v680 = vshrl.u32 %v679, 7
    %v681 = vsub.s32 1, %v680
    %v682 = vrot.slane %v674, %v681
    %vm683 = vcmp.lt.s32.totalorder %v671, %v678
    %vm684 = vcmp.lt.s32.totalorder %v671, %v682
    %vm685 = vcmp.lt.s32.totalorder %v672, %v678
    %vm686 = vcmp.lt.s32.totalorder %v672, %v682
    %vm687 = vcmp.lt.s32.totalorder %v673, %v678
    %vm688 = vcmp.lt.s32.totalorder %v673, %v682
    %v689 = vsel %vm683, %v600, -1e+30
    %v690 = vsel %vm684, %v602, -1e+30
    %v691 = vsel %vm685, %v606, -1e+30
    %v692 = vsel %vm686, %v608, -1e+30
    %v693 = vsel %vm687, %v612, -1e+30
    %v694 = vsel %vm688, %v614, -1e+30
    %v695 = vsel %vm683, %v618, -1e+30
    %v696 = vsel %vm684, %v620, -1e+30
    %v697 = vsel %vm685, %v624, -1e+30
    %v698 = vsel %vm686, %v626, -1e+30
    %v699 = vsel %vm687, %v630, -1e+30
    %v700 = vsel %vm688, %v632, -1e+30
    %v701 = vsel %vm683, %v636, -1e+30
    %v702 = vsel %vm684, %v638, -1e+30
    %v703 = vsel %vm685, %v642, -1e+30
    %v704 = vsel %vm686, %v644, -1e+30
    %v705 = vsel %vm687, %v648, -1e+30
    %v706 = vsel %vm688, %v650, -1e+30
    %v707 = vsel %vm683, %v654, -1e+30
    %v708 = vsel %vm684, %v656, -1e+30
    %v709 = vsel %vm685, %v660, -1e+30
    %v710 = vsel %vm686, %v662, -1e+30
    %v711 = vsel %vm687, %v666, -1e+30
    %v712 = vsel %vm688, %v668, -1e+30
    %v713 = vmax.f32 %v689, %v691
    %v714 = vmax.f32 %v713, %v693
    %v715 = vrot.slane %v714, 4
    %v716 = vmax.f32 %v714, %v715
    %v717 = vrot.slane %v716, 2
    %v718 = vmax.f32 %v716, %v717
    %v719 = vrot.slane %v718, 1
    %v720 = vmax.f32 %v718, %v719
    %v721 = vmax.f32 %v690, %v692
    %v722 = vmax.f32 %v721, %v694
    %v723 = vrot.slane %v722, 4
    %v724 = vmax.f32 %v722, %v723
    %v725 = vrot.slane %v724, 2
    %v726 = vmax.f32 %v724, %v725
    %v727 = vrot.slane %v726, 1
    %v728 = vmax.f32 %v726, %v727
    %v729 = vmax.f32 %v695, %v697
    %v730 = vmax.f32 %v729, %v699
    %v731 = vrot.slane %v730, 4
    %v732 = vmax.f32 %v730, %v731
    %v733 = vrot.slane %v732, 2
    %v734 = vmax.f32 %v732, %v733
    %v735 = vrot.slane %v734, 1
    %v736 = vmax.f32 %v734, %v735
    %v737 = vmax.f32 %v696, %v698
    %v738 = vmax.f32 %v737, %v700
    %v739 = vrot.slane %v738, 4
    %v740 = vmax.f32 %v738, %v739
    %v741 = vrot.slane %v740, 2
    %v742 = vmax.f32 %v740, %v741
    %v743 = vrot.slane %v742, 1
    %v744 = vmax.f32 %v742, %v743
    %v745 = vmax.f32 %v701, %v703
    %v746 = vmax.f32 %v745, %v705
    %v747 = vrot.slane %v746, 4
    %v748 = vmax.f32 %v746, %v747
    %v749 = vrot.slane %v748, 2
    %v750 = vmax.f32 %v748, %v749
    %v751 = vrot.slane %v750, 1
    %v752 = vmax.f32 %v750, %v751
    %v753 = vmax.f32 %v702, %v704
    %v754 = vmax.f32 %v753, %v706
    %v755 = vrot.slane %v754, 4
    %v756 = vmax.f32 %v754, %v755
    %v757 = vrot.slane %v756, 2
    %v758 = vmax.f32 %v756, %v757
    %v759 = vrot.slane %v758, 1
    %v760 = vmax.f32 %v758, %v759
    %v761 = vmax.f32 %v707, %v709
    %v762 = vmax.f32 %v761, %v711
    %v763 = vrot.slane %v762, 4
    %v764 = vmax.f32 %v762, %v763
    %v765 = vrot.slane %v764, 2
    %v766 = vmax.f32 %v764, %v765
    %v767 = vrot.slane %v766, 1
    %v768 = vmax.f32 %v766, %v767
    %v769 = vmax.f32 %v708, %v710
    %v770 = vmax.f32 %v769, %v712
    %v771 = vrot.slane %v770, 4
    %v772 = vmax.f32 %v770, %v771
    %v773 = vrot.slane %v772, 2
    %v774 = vmax.f32 %v772, %v773
    %v775 = vrot.slane %v774, 1
    %v776 = vmax.f32 %v774, %v775
    %v777 = vld [vmem:[%s4] sm:$0xff]
    %v778 = vld [vmem:[%s4 + $0x8] sm:$0xff]
    %v779 = vld [vmem:[%s4 + $0x10] sm:$0xff]
    %v780 = vld [vmem:[%s4 + $0x18] sm:$0xff]
    %v781 = vld [vmem:[%s4 + $0x20] sm:$0xff]
    %v782 = vld [vmem:[%s4 + $0x28] sm:$0xff]
    %v783 = vld [vmem:[%s4 + $0x30] sm:$0xff]
    %v784 = vld [vmem:[%s4 + $0x38] sm:$0xff]
    %v785 = vld [vmem:[%s4 + $0x40] sm:$0xff]
    %v786 = vld [vmem:[%s4 + $0x48] sm:$0xff]
    %v787 = vld [vmem:[%s4 + $0x50] sm:$0xff]
    %v788 = vld [vmem:[%s4 + $0x58] sm:$0xff]
    %v789 = vld [vmem:[%s4 + $0x60] sm:$0xff]
    %v790 = vld [vmem:[%s4 + $0x68] sm:$0xff]
    %v791 = vld [vmem:[%s4 + $0x70] sm:$0xff]
    %v792 = vld [vmem:[%s4 + $0x78] sm:$0xff]
    %v793 = vld [vmem:[%s4 + $0x80] sm:$0xff]
    %v794 = vld [vmem:[%s4 + $0x88] sm:$0xff]
    %v795 = vld [vmem:[%s4 + $0x90] sm:$0xff]
    %v796 = vld [vmem:[%s4 + $0x98] sm:$0xff]
    %v797 = vld [vmem:[%s4 + $0xa0] sm:$0xff]
    %v798 = vld [vmem:[%s4 + $0xa8] sm:$0xff]
    %v799 = vld [vmem:[%s4 + $0xb0] sm:$0xff]
    %v800 = vld [vmem:[%s4 + $0xb8] sm:$0xff]
    %v801 = vld [vmem:[%s4 + $0xc0] sm:$0xff]
    %v802 = vld [vmem:[%s4 + $0xc8] sm:$0xff]
    %v803 = vld [vmem:[%s4 + $0xd0] sm:$0xff]
    %v804 = vld [vmem:[%s4 + $0xd8] sm:$0xff]
    %v805 = vld [vmem:[%s4 + $0xe0] sm:$0xff]
    %v806 = vld [vmem:[%s4 + $0xe8] sm:$0xff]
    %v807 = vld [vmem:[%s4 + $0xf0] sm:$0xff]
    %v808 = vld [vmem:[%s4 + $0xf8] sm:$0xff]
    %v809 = vld [vmem:[%s4 + $0x100] sm:$0xff]
    %v810 = vld [vmem:[%s4 + $0x108] sm:$0xff]
    %v811 = vld [vmem:[%s4 + $0x110] sm:$0xff]
    %v812 = vld [vmem:[%s4 + $0x118] sm:$0xff]
    %v813 = vld [vmem:[%s4 + $0x120] sm:$0xff]
    %v814 = vld [vmem:[%s4 + $0x128] sm:$0xff]
    %v815 = vld [vmem:[%s4 + $0x130] sm:$0xff]
    %v816 = vld [vmem:[%s4 + $0x138] sm:$0xff]
    %v817 = vld [vmem:[%s4 + $0x140] sm:$0xff]
    %v818 = vld [vmem:[%s4 + $0x148] sm:$0xff]
    %v819 = vld [vmem:[%s4 + $0x150] sm:$0xff]
    %v820 = vld [vmem:[%s4 + $0x158] sm:$0xff]
    %v821 = vld [vmem:[%s4 + $0x160] sm:$0xff]
    %v822 = vld [vmem:[%s4 + $0x168] sm:$0xff]
    %v823 = vld [vmem:[%s4 + $0x170] sm:$0xff]
    %v824 = vld [vmem:[%s4 + $0x178] sm:$0xff]
    %v825 = vld [vmem:[%s4 + $0x180] sm:$0xff]
    %v826 = vld [vmem:[%s4 + $0x188] sm:$0xff]
    %v827 = vld [vmem:[%s4 + $0x190] sm:$0xff]
    %v828 = vld [vmem:[%s4 + $0x198] sm:$0xff]
    %v829 = vld [vmem:[%s4 + $0x1a0] sm:$0xff]
    %v830 = vld [vmem:[%s4 + $0x1a8] sm:$0xff]
    %v831 = vld [vmem:[%s4 + $0x1b0] sm:$0xff]
    %v832 = vld [vmem:[%s4 + $0x1b8] sm:$0xff]
    %v833 = vld [vmem:[%s4 + $0x1c0] sm:$0xff]
    %v834 = vld [vmem:[%s4 + $0x1c8] sm:$0xff]
    %v835 = vld [vmem:[%s4 + $0x1d0] sm:$0xff]
    %v836 = vld [vmem:[%s4 + $0x1d8] sm:$0xff]
    %v837 = vld [vmem:[%s4 + $0x1e0] sm:$0xff]
    %v838 = vld [vmem:[%s4 + $0x1e8] sm:$0xff]
    %v839 = vld [vmem:[%s4 + $0x1f0] sm:$0xff]
    %v840 = vld [vmem:[%s4 + $0x1f8] sm:$0xff]
    %v841 = vld [vmem:[%s4 + $0x200] sm:$0xff]
    %v842 = vld [vmem:[%s4 + $0x208] sm:$0xff]
    %v843 = vld [vmem:[%s4 + $0x210] sm:$0xff]
    %v844 = vld [vmem:[%s4 + $0x218] sm:$0xff]
    %v845 = vld [vmem:[%s4 + $0x220] sm:$0xff]
    %v846 = vld [vmem:[%s4 + $0x228] sm:$0xff]
    %v847 = vld [vmem:[%s4 + $0x230] sm:$0xff]
    %v848 = vld [vmem:[%s4 + $0x238] sm:$0xff]
    %v849 = vld [vmem:[%s4 + $0x240] sm:$0xff]
    %v850 = vld [vmem:[%s4 + $0x248] sm:$0xff]
    %v851 = vld [vmem:[%s4 + $0x250] sm:$0xff]
    %v852 = vld [vmem:[%s4 + $0x258] sm:$0xff]
    %v853 = vld [vmem:[%s4 + $0x260] sm:$0xff]
    %v854 = vld [vmem:[%s4 + $0x268] sm:$0xff]
    %v855 = vld [vmem:[%s4 + $0x270] sm:$0xff]
    %v856 = vld [vmem:[%s4 + $0x278] sm:$0xff]
    %v857 = vld [vmem:[%s4 + $0x280] sm:$0xff]
    %v858 = vld [vmem:[%s4 + $0x288] sm:$0xff]
    %v859 = vld [vmem:[%s4 + $0x290] sm:$0xff]
    %v860 = vld [vmem:[%s4 + $0x298] sm:$0xff]
    %v861 = vld [vmem:[%s4 + $0x2a0] sm:$0xff]
    %v862 = vld [vmem:[%s4 + $0x2a8] sm:$0xff]
    %v863 = vld [vmem:[%s4 + $0x2b0] sm:$0xff]
    %v864 = vld [vmem:[%s4 + $0x2b8] sm:$0xff]
    %v865 = vld [vmem:[%s4 + $0x2c0] sm:$0xff]
    %v866 = vld [vmem:[%s4 + $0x2c8] sm:$0xff]
    %v867 = vld [vmem:[%s4 + $0x2d0] sm:$0xff]
    %v868 = vld [vmem:[%s4 + $0x2d8] sm:$0xff]
    %v869 = vld [vmem:[%s4 + $0x2e0] sm:$0xff]
    %v870 = vld [vmem:[%s4 + $0x2e8] sm:$0xff]
    %v871 = vld [vmem:[%s4 + $0x2f0] sm:$0xff]
    %v872 = vld [vmem:[%s4 + $0x2f8] sm:$0xff]
    %v873 = vld [vmem:[%s4 + $0x300] sm:$0xff]
    %v874 = vld [vmem:[%s4 + $0x308] sm:$0xff]
    %v875 = vld [vmem:[%s4 + $0x310] sm:$0xff]
    %v876 = vld [vmem:[%s4 + $0x318] sm:$0xff]
    %v877 = vld [vmem:[%s4 + $0x320] sm:$0xff]
    %v878 = vld [vmem:[%s4 + $0x328] sm:$0xff]
    %v879 = vld [vmem:[%s4 + $0x330] sm:$0xff]
    %v880 = vld [vmem:[%s4 + $0x338] sm:$0xff]
    %v881 = vld [vmem:[%s4 + $0x340] sm:$0xff]
    %v882 = vld [vmem:[%s4 + $0x348] sm:$0xff]
    %v883 = vld [vmem:[%s4 + $0x350] sm:$0xff]
    %v884 = vld [vmem:[%s4 + $0x358] sm:$0xff]
    %v885 = vld [vmem:[%s4 + $0x360] sm:$0xff]
    %v886 = vld [vmem:[%s4 + $0x368] sm:$0xff]
    %v887 = vld [vmem:[%s4 + $0x370] sm:$0xff]
    %v888 = vld [vmem:[%s4 + $0x378] sm:$0xff]
    %v889 = vld [vmem:[%s4 + $0x380] sm:$0xff]
    %v890 = vld [vmem:[%s4 + $0x388] sm:$0xff]
    %v891 = vld [vmem:[%s4 + $0x390] sm:$0xff]
    %v892 = vld [vmem:[%s4 + $0x398] sm:$0xff]
    %v893 = vld [vmem:[%s4 + $0x3a0] sm:$0xff]
    %v894 = vld [vmem:[%s4 + $0x3a8] sm:$0xff]
    %v895 = vld [vmem:[%s4 + $0x3b0] sm:$0xff]
    %v896 = vld [vmem:[%s4 + $0x3b8] sm:$0xff]
    %v897 = vld [vmem:[%s4 + $0x3c0] sm:$0xff]
    %v898 = vld [vmem:[%s4 + $0x3c8] sm:$0xff]
    %v899 = vld [vmem:[%s4 + $0x3d0] sm:$0xff]
    %v900 = vld [vmem:[%s4 + $0x3d8] sm:$0xff]
    %v901 = vld [vmem:[%s4 + $0x3e0] sm:$0xff]
    %v902 = vld [vmem:[%s4 + $0x3e8] sm:$0xff]
    %v903 = vld [vmem:[%s4 + $0x3f0] sm:$0xff]
    %v904 = vld [vmem:[%s4 + $0x3f8] sm:$0xff]
    %v905 = vld [vmem:[%s5] sm:$0xf]
    %v907 = vlaneseq
    %v908 = vshrl.u32 %v907, 7
    %v909 = vsub.s32 0, %v908
    %v910 = vrot.slane %v905, %v909
    %v911 = vlaneseq
    %v912 = vshrl.u32 %v911, 7
    %v913 = vsub.s32 1, %v912
    %v914 = vrot.slane %v905, %v913
    %v915 = vlaneseq
    %v916 = vshrl.u32 %v915, 7
    %v917 = vsub.s32 2, %v916
    %v918 = vrot.slane %v905, %v917
    %v919 = vlaneseq
    %v920 = vshrl.u32 %v919, 7
    %v921 = vsub.s32 3, %v920
    %v922 = vrot.slane %v905, %v921
    %vm935 = vcmask 1041409
    %v936 = vsel %vm935, %v736, %v720
    %vm937 = vcmask 1042434
    %v938 = vsel %vm937, %v752, %v936
    %vm939 = vcmask 1043459
    %v940 = vsel %vm939, %v768, %v938
    %v941 = vsel %vm935, %v744, %v728
    %v942 = vsel %vm937, %v760, %v941
    %v943 = vsel %vm939, %v776, %v942
    %946 = vmatprep.subr.mxu0 %v838
    %947 = vmatpush1.msra.mxu0 %v837
    %948 = vmatprep.subr.mxu0 %v834
    %949 = vmatpush1.msra.mxu0 %v833
    %950 = vmatprep.subr.mxu0 %v830
    %951 = vmatpush1.msra.mxu0 %v829
    %952 = vmatprep.subr.mxu0 %v826
    %953 = vmatpush1.msra.mxu0 %v825
    %954 = vmatprep.subr.mxu0 %v822
    %955 = vmatpush1.msra.mxu0 %v821
    %956 = vmatprep.subr.mxu0 %v818
    %957 = vmatpush1.msra.mxu0 %v817
    %958 = vmatprep.subr.mxu0 %v814
    %959 = vmatpush1.msra.mxu0 %v813
    %960 = vmatprep.subr.mxu0 %v810
    %961 = vmatpush1.msra.mxu0 %v809
    %962 = vmatprep.subr.mxu0 %v806
    %963 = vmatpush1.msra.mxu0 %v805
    %964 = vmatprep.subr.mxu0 %v802
    %965 = vmatpush1.msra.mxu0 %v801
    %966 = vmatprep.subr.mxu0 %v798
    %967 = vmatpush1.msra.mxu0 %v797
    %968 = vmatprep.subr.mxu0 %v794
    %969 = vmatpush1.msra.mxu0 %v793
    %970 = vmatprep.subr.mxu0 %v790
    %971 = vmatpush1.msra.mxu0 %v789
    %972 = vmatprep.subr.mxu0 %v786
    %973 = vmatpush1.msra.mxu0 %v785
    %974 = vmatprep.subr.mxu0 %v782
    %975 = vmatpush1.msra.mxu0 %v781
    %976 = vmatprep.subr.mxu0 %v778
    %977 = vmatpush1.msra.mxu0 %v777
    %978 = vmatprep.subr.mxu0 %v902
    %979 = vmatpush2.msra.mxu0 %v901
    %980 = vmatprep.subr.mxu0 %v898
    %981 = vmatpush2.msra.mxu0 %v897
    %982 = vmatprep.subr.mxu0 %v894
    %983 = vmatpush2.msra.mxu0 %v893
    %984 = vmatprep.subr.mxu0 %v890
    %985 = vmatpush2.msra.mxu0 %v889
    %986 = vmatprep.subr.mxu0 %v886
    %987 = vmatpush2.msra.mxu0 %v885
    %988 = vmatprep.subr.mxu0 %v882
    %989 = vmatpush2.msra.mxu0 %v881
    %990 = vmatprep.subr.mxu0 %v878
    %991 = vmatpush2.msra.mxu0 %v877
    %992 = vmatprep.subr.mxu0 %v874
    %993 = vmatpush2.msra.mxu0 %v873
    %994 = vmatprep.subr.mxu0 %v870
    %995 = vmatpush2.msra.mxu0 %v869
    %996 = vmatprep.subr.mxu0 %v866
    %997 = vmatpush2.msra.mxu0 %v865
    %998 = vmatprep.subr.mxu0 %v862
    %999 = vmatpush2.msra.mxu0 %v861
    %1000 = vmatprep.subr.mxu0 %v858
    %1001 = vmatpush2.msra.mxu0 %v857
    %1002 = vmatprep.subr.mxu0 %v854
    %1003 = vmatpush2.msra.mxu0 %v853
    %1004 = vmatprep.subr.mxu0 %v850
    %1005 = vmatpush2.msra.mxu0 %v849
    %1006 = vmatprep.subr.mxu0 %v846
    %1007 = vmatpush2.msra.mxu0 %v845
    %1008 = vmatprep.subr.mxu0 %v842
    %1009 = vmatpush2.msra.mxu0 %v841
    %1010 = vmatprep.mubr.f32.mxu0 %v943
    %1011 = vmatmul.mubr.f32.gmra.mxu0 %v940
    %v1012 = vpop.f32.mrf.mxu0
    %v1013 = vadd.f32 %v910, %v1012
    %v1014 = vpop.f32.mrf.mxu0
    %v1015 = vadd.f32 %v914, %v1014
    %1016 = vdwg.mxu0
    %1017 = vmatprep.subr.mxu0 %v840
    %1018 = vmatpush1.msra.mxu0 %v839
    %1019 = vmatprep.subr.mxu0 %v836
    %1020 = vmatpush1.msra.mxu0 %v835
    %1021 = vmatprep.subr.mxu0 %v832
    %1022 = vmatpush1.msra.mxu0 %v831
    %1023 = vmatprep.subr.mxu0 %v828
    %1024 = vmatpush1.msra.mxu0 %v827
    %1025 = vmatprep.subr.mxu0 %v824
    %1026 = vmatpush1.msra.mxu0 %v823
    %1027 = vmatprep.subr.mxu0 %v820
    %1028 = vmatpush1.msra.mxu0 %v819
    %1029 = vmatprep.subr.mxu0 %v816
    %1030 = vmatpush1.msra.mxu0 %v815
    %1031 = vmatprep.subr.mxu0 %v812
    %1032 = vmatpush1.msra.mxu0 %v811
    %1033 = vmatprep.subr.mxu0 %v808
    %1034 = vmatpush1.msra.mxu0 %v807
    %1035 = vmatprep.subr.mxu0 %v804
    %1036 = vmatpush1.msra.mxu0 %v803
    %1037 = vmatprep.subr.mxu0 %v800
    %1038 = vmatpush1.msra.mxu0 %v799
    %1039 = vmatprep.subr.mxu0 %v796
    %1040 = vmatpush1.msra.mxu0 %v795
    %1041 = vmatprep.subr.mxu0 %v792
    %1042 = vmatpush1.msra.mxu0 %v791
    %1043 = vmatprep.subr.mxu0 %v788
    %1044 = vmatpush1.msra.mxu0 %v787
    %1045 = vmatprep.subr.mxu0 %v784
    %1046 = vmatpush1.msra.mxu0 %v783
    %1047 = vmatprep.subr.mxu0 %v780
    %1048 = vmatpush1.msra.mxu0 %v779
    %1049 = vmatprep.subr.mxu0 %v904
    %1050 = vmatpush2.msra.mxu0 %v903
    %1051 = vmatprep.subr.mxu0 %v900
    %1052 = vmatpush2.msra.mxu0 %v899
    %1053 = vmatprep.subr.mxu0 %v896
    %1054 = vmatpush2.msra.mxu0 %v895
    %1055 = vmatprep.subr.mxu0 %v892
    %1056 = vmatpush2.msra.mxu0 %v891
    %1057 = vmatprep.subr.mxu0 %v888
    %1058 = vmatpush2.msra.mxu0 %v887
    %1059 = vmatprep.subr.mxu0 %v884
    %1060 = vmatpush2.msra.mxu0 %v883
    %1061 = vmatprep.subr.mxu0 %v880
    %1062 = vmatpush2.msra.mxu0 %v879
    %1063 = vmatprep.subr.mxu0 %v876
    %1064 = vmatpush2.msra.mxu0 %v875
    %1065 = vmatprep.subr.mxu0 %v872
    %1066 = vmatpush2.msra.mxu0 %v871
    %1067 = vmatprep.subr.mxu0 %v868
    %1068 = vmatpush2.msra.mxu0 %v867
    %1069 = vmatprep.subr.mxu0 %v864
    %1070 = vmatpush2.msra.mxu0 %v863
    %1071 = vmatprep.subr.mxu0 %v860
    %1072 = vmatpush2.msra.mxu0 %v859
    %1073 = vmatprep.subr.mxu0 %v856
    %1074 = vmatpush2.msra.mxu0 %v855
    %1075 = vmatprep.subr.mxu0 %v852
    %1076 = vmatpush2.msra.mxu0 %v851
    %1077 = vmatprep.subr.mxu0 %v848
    %1078 = vmatpush2.msra.mxu0 %v847
    %1079 = vmatprep.subr.mxu0 %v844
    %1080 = vmatpush2.msra.mxu0 %v843
    %1081 = vmatprep.mubr.f32.mxu0 %v943
    %1082 = vmatmul.mubr.f32.gmra.mxu0 %v940
    %v1083 = vpop.f32.mrf.mxu0
    %v1084 = vadd.f32 %v918, %v1083
    %v1085 = vpop.f32.mrf.mxu0
    %v1086 = vadd.f32 %v922, %v1085
    %1087 = vdwg.mxu0
    %v1088 = vmax.f32 %v1013, 0.0
    %v1089 = vmax.f32 %v1015, 0.0
    %v1090 = vxor.u32 %v1084, 2147483648
    %v1091 = vxor.u32 %v1086, 2147483648
    %v1092 = vmul.f32 %v1090, 1.442695
    %v1093 = vpow.pop %v1092
    %v1094 = vmul.f32 %v1091, 1.442695
    %v1095 = vpow.pop %v1094
    %v1096 = vadd.f32 %v1093, 1.0
    %v1097 = vadd.f32 %v1095, 1.0
    %v1098 = vrcp.pop %v1096
    %v1099 = vmul.f32 1.0, %v1098
    %v1100 = vrcp.pop %v1097
    %v1101 = vmul.f32 1.0, %v1100
    %v1102 = vmul.f32 %v1099, %v1088
    %v1103 = vmul.f32 %v1101, %v1089
    %v1104 = vsub.f32 1.0, %v1099
    %v1105 = vsub.f32 1.0, %v1101
    %v1106 = vmul.f32 %v1104, %v940
    %v1107 = vmul.f32 %v1105, %v943
    %v1108 = vadd.f32 %v1102, %v1106
    %v1109 = vadd.f32 %v1103, %v1107
    %v1110 = vld [vmem:[%s6] sm:$0xff]
    %v1112 = vcombine.high %v1110, %v1110
    %v1114 = vmul.f32 %v1108, %v1110
    %v1115 = vmul.f32 %v1109, %v1112
    %v1118 = vcombine.low %v1114, %v1115
    %1120 = vst [vmem:[#allocation2] sm:$0xff] %v1118
    // Predicated region
    $region30: #{discriminator_forward.1} parent=1 // pred_check
      _
    $region31: #{discriminator_forward.1} parent=1 // pred_check_branch
      %1122 = sbr.rel (0) target = $region33
    $region32: #{discriminator_forward.1} parent=1 // pred_region
      %s1124 = ssub.s32 128, 128
      %1125 = vsyncadd [#allocation3], %s1124
      %s1127 = sshll.u32 [#allocation2], 4
      %s1128 = int_to_ptr.vmem [resolvable:$true] %s1127
      %1130 = dma.vmem_to_hbm [thread:$0]  %s1128, 128, %s7, [#allocation3]
    $region33: #{discriminator_forward.1} parent=1 // pred_fallthru
      _
    // Predicated region
    $region34: #{discriminator_forward.1} parent=1 // pred_check
      _
    $region35: #{discriminator_forward.1} parent=1 // pred_check_branch
      %1132 = sbr.rel (0) target = $region37
    $region36: #{discriminator_forward.1} parent=1 // pred_region
      %1133 = dma.done [#allocation3], 128
    $region37: #{discriminator_forward.1} parent=1 // pred_fallthru
      _
    %1134 = vsyncpa [#allocation3], 1

</llo_original>
